<compile_context>
chip_gen: v7x
topology: tpu7x:2x2x1
jax: 0.10.0
libtpu: 0.0.40
codegen_flags: <defaults>
</compile_context>

<pallas_src>
import functools
import math

import jax
import jax.numpy as jnp
from jax.experimental import pallas as pl
from jax.experimental.pallas import tpu as pltpu

LN_EPS = 1e-6
NEG_INF_FILL = -1e9

# Flips to False at runtime if pl.Buffered(1) (single-buffering of grid-invariant weights)
# is not supported by the installed Pallas version.
_SINGLE_BUFFER_INVARIANTS = True


def _round_up(n, m):
    return ((n + m - 1) // m) * m


# ---------------------------------------------------------------------------
# Linear kernel:  y = act(x @ W + b) [+ residual]
# ---------------------------------------------------------------------------
@functools.lru_cache(maxsize=None)
def _make_linear_kernel(activation, add_residual):
    def kernel(*refs):
        if add_residual:
            x_ref, w_ref, b_ref, r_ref, o_ref = refs
        else:
            x_ref, w_ref, b_ref, o_ref = refs
            r_ref = None
        # bf16 operands -> MXU, f32 accumulation (perf feedback).
        acc = jnp.dot(
            x_ref[...].astype(jnp.bfloat16),
            w_ref[...].astype(jnp.bfloat16),
            preferred_element_type=jnp.float32,
        )
        acc = acc + b_ref[...].astype(jnp.float32)  # (1, N) broadcasts over rows
        if activation == "relu":
            acc = jnp.maximum(acc, 0.0)
        if add_residual:
            acc = acc + r_ref[...].astype(jnp.float32)
        o_ref[...] = acc.astype(o_ref.dtype)

    return kernel


def linear(x2d, weight, bias, *, activation=None, residual=None, tile_m=256):
    """x2d: [M, D]; weight: [D, N]; bias: [N]; residual: optional [M, N] added to the output."""
    global _SINGLE_BUFFER_INVARIANTS

    M, D = x2d.shape
    N = weight.shape[1]

    # Large M tiles (feeds the 128/256-wide MXU); pad M instead of asserting divisibility.
    tm = min(tile_m, _round_up(M, 8))
    Mp = _round_up(M, tm)
    pad = Mp - M
    if pad:
        x2d = jnp.pad(x2d, ((0, pad), (0, 0)))
        if residual is not None:
            residual = jnp.pad(residual, ((0, pad), (0, 0)))
    b2d = bias.reshape(1, N)

    add_residual = residual is not None
    args = [x2d, weight, b2d] + ([residual] if add_residual else [])

    flops = 2 * Mp * D * N
    bytes_accessed = 4 * (Mp * D + D * N + N + Mp * N * (2 if add_residual else 1))
    # VMEM budget: double-buffered x/out (+residual) tiles + single weight copy + headroom.
    vmem_needed = 4 * (2 * tm * D + D * N + N + (3 + 2 * int(add_residual)) * tm * N)
    vmem_limit = int(min(max(2 * vmem_needed, 8 << 20), 48 << 20))

    def build(single_buffer_weights):
        if single_buffer_weights:
            # Grid-invariant weight/bias: no double buffering (perf feedback).
            w_spec = pl.BlockSpec((D, N), lambda i: (0, 0), pipeline_mode=pl.Buffered(1))
            b_spec = pl.BlockSpec((1, N), lambda i: (0, 0), pipeline_mode=pl.Buffered(1))
        else:
            w_spec = pl.BlockSpec((D, N), lambda i: (0, 0))
            b_spec = pl.BlockSpec((1, N), lambda i: (0, 0))
        in_specs = [pl.BlockSpec((tm, D), lambda i: (i, 0)), w_spec, b_spec]
        if add_residual:
            in_specs.append(pl.BlockSpec((tm, N), lambda i: (i, 0)))
        return pl.pallas_call(
            _make_linear_kernel(activation, add_residual),
            out_shape=jax.ShapeDtypeStruct((Mp, N), x2d.dtype),
            grid_spec=pltpu.PrefetchScalarGridSpec(
                num_scalar_prefetch=0,
                grid=(Mp // tm,),
                in_specs=in_specs,
                out_specs=pl.BlockSpec((tm, N), lambda i: (i, 0)),
            ),
            compiler_params=pltpu.CompilerParams(
                dimension_semantics=("parallel",),
                vmem_limit_bytes=vmem_limit,
            ),
            cost_estimate=pl.CostEstimate(
                flops=int(flops), transcendentals=0, bytes_accessed=int(bytes_accessed)
            ),
        )

    if _SINGLE_BUFFER_INVARIANTS:
        try:
            out = build(True)(*args)
        except Exception:  # fall back if pipeline_mode=Buffered(1) is unsupported here
            _SINGLE_BUFFER_INVARIANTS = False
            out = build(False)(*args)
    else:
        out = build(False)(*args)

    return out[:M] if pad else out


# ---------------------------------------------------------------------------
# LayerNormalization kernel (matches torch: unbiased std, divide by (std + eps))
# ---------------------------------------------------------------------------
@functools.lru_cache(maxsize=None)
def _make_ln_kernel(eps, features):
    inv_nm1 = 1.0 / (features - 1)  # unbiased variance, matches torch.Tensor.std default

    def kernel(x_ref, a_ref, b_ref, o_ref):
        x = x_ref[...].astype(jnp.float32)
        mean = jnp.mean(x, axis=-1, keepdims=True)
        diff = x - mean
        var = jnp.sum(diff * diff, axis=-1, keepdims=True) * inv_nm1
        y = a_ref[...] * diff / (jnp.sqrt(var) + eps) + b_ref[...]
        o_ref[...] = y.astype(o_ref.dtype)

    return kernel


def layer_norm(x, alpha, beta, *, eps=LN_EPS, tile_m=256):
    shape = x.shape
    D = shape[-1]
    x2d = x.reshape(-1, D)
    M = x2d.shape[0]
    tm = min(tile_m, _round_up(M, 8))
    Mp = _round_up(M, tm)
    pad = Mp - M
    if pad:
        x2d = jnp.pad(x2d, ((0, pad), (0, 0)))

    out = pl.pallas_call(
        _make_ln_kernel(float(eps), int(D)),
        out_shape=jax.ShapeDtypeStruct((Mp, D), x.dtype),
        grid_spec=pltpu.PrefetchScalarGridSpec(
            num_scalar_prefetch=0,
            grid=(Mp // tm,),
            in_specs=[
                pl.BlockSpec((tm, D), lambda i: (i, 0)),
                pl.BlockSpec((1, D), lambda i: (0, 0)),
                pl.BlockSpec((1, D), lambda i: (0, 0)),
            ],
            out_specs=pl.BlockSpec((tm, D), lambda i: (i, 0)),
        ),
        compiler_params=pltpu.CompilerParams(dimension_semantics=("parallel",)),
    )(x2d, alpha.reshape(1, D), beta.reshape(1, D))

    if pad:
        out = out[:M]
    return out.reshape(shape)


# ---------------------------------------------------------------------------
# Per-(batch, head) masked scaled-dot-product attention kernel
# ---------------------------------------------------------------------------
@functools.lru_cache(maxsize=None)
def _make_attention_kernel(scale):
    def kernel(q_ref, k_ref, v_ref, m_ref, o_ref):
        q = q_ref[...].astype(jnp.bfloat16)  # (Sq, Dk)
        k = k_ref[...].astype(jnp.bfloat16)  # (Skv, Dk)
        v = v_ref[...].astype(jnp.bfloat16)  # (Skv, Dk)
        # scores = (q @ k^T) * (1/sqrt(d_k)); contract last dims (no explicit transpose needed).
        s = jax.lax.dot_general(
            q, k, (((1,), (1,)), ((), ())), preferred_element_type=jnp.float32
        ) * scale                                           # (Sq, Skv), f32
        s = jnp.where(m_ref[...] == 0, NEG_INF_FILL, s)     # masked_fill_(mask == 0, -1e9)
        s = s - jnp.max(s, axis=-1, keepdims=True)          # stable softmax in f32
        p = jnp.exp(s)
        p = p / jnp.sum(p, axis=-1, keepdims=True)
        ctx = jnp.dot(p.astype(jnp.bfloat16), v, preferred_element_type=jnp.float32)
        o_ref[...] = ctx.astype(o_ref.dtype)

    return kernel


def scaled_dot_product_attention(q, k, v, mask, *, scale):
    """q: [B,H,Sq,Dk]; k,v: [B,H,Skv,Dk]; mask: [B,1,Sq,Skv] (1=keep, 0=mask)."""
    B, H, Sq, Dk = q.shape
    Skv = k.shape[2]

    return pl.pallas_call(
        _make_attention_kernel(float(scale)),
        out_shape=jax.ShapeDtypeStruct((B, H, Sq, Dk), q.dtype),
        grid_spec=pltpu.PrefetchScalarGridSpec(
            num_scalar_prefetch=0,
            grid=(B, H),
            in_specs=[
                pl.BlockSpec((None, None, Sq, Dk), lambda b, h: (b, h, 0, 0)),
                pl.BlockSpec((None, None, Skv, Dk), lambda b, h: (b, h, 0, 0)),
                pl.BlockSpec((None, None, Skv, Dk), lambda b, h: (b, h, 0, 0)),
                pl.BlockSpec((None, None, Sq, Skv), lambda b, h: (b, 0, 0, 0)),
            ],
            out_specs=pl.BlockSpec((None, None, Sq, Dk), lambda b, h: (b, h, 0, 0)),
        ),
        compiler_params=pltpu.CompilerParams(
            dimension_semantics=("parallel", "parallel"),
        ),
        cost_estimate=pl.CostEstimate(
            flops=int(4 * B * H * Sq * Skv * Dk),
            transcendentals=int(B * H * Sq * Skv),
            bytes_accessed=int(4 * (q.size + k.size + v.size + mask.size + B * H * Sq * Dk)),
        ),
    )(q, k, v, mask)


# ---------------------------------------------------------------------------
# Module composition (head split/merge are cheap layout ops done in the JAX wrapper)
# ---------------------------------------------------------------------------
def multi_head_attention(q_in, k_in, v_in, mask, params, prefix, *, h):
    """q/k/v projections + per-head attention; returns concatenated heads (before w_o)."""
    B, Sq, D = q_in.shape
    Skv = k_in.shape[1]
    dk = D // h
    q = linear(q_in.reshape(-1, D), params[f"{prefix}_wq_w"], params[f"{prefix}_wq_b"]).reshape(B, Sq, D)
    k = linear(k_in.reshape(-1, D), params[f"{prefix}_wk_w"], params[f"{prefix}_wk_b"]).reshape(B, Skv, D)
    v = linear(v_in.reshape(-1, D), params[f"{prefix}_wv_w"], params[f"{prefix}_wv_b"]).reshape(B, Skv, D)
    qh = q.reshape(B, Sq, h, dk).transpose(0, 2, 1, 3)
    kh = k.reshape(B, Skv, h, dk).transpose(0, 2, 1, 3)
    vh = v.reshape(B, Skv, h, dk).transpose(0, 2, 1, 3)
    ctx = scaled_dot_product_attention(qh, kh, vh, mask, scale=1.0 / math.sqrt(dk))
    return ctx.transpose(0, 2, 1, 3).reshape(B, Sq, D)


def decoder_block(x, encoder_output, src_mask, tgt_mask, params, *, h):
    """Pallas forward pass of DecoderBlock (dropout = identity / eval mode)."""
    B, Sq, D = x.shape

    # Residual connection 0: self-attention.
    xn = layer_norm(x, params["ln0_alpha"], params["ln0_beta"])
    sa = multi_head_attention(xn, xn, xn, tgt_mask, params, "self", h=h)
    x = linear(sa.reshape(-1, D), params["self_wo_w"], params["self_wo_b"],
               residual=x.reshape(-1, D)).reshape(B, Sq, D)

    # Residual connection 1: cross-attention (k/v come from the raw encoder output).
    xn = layer_norm(x, params["ln1_alpha"], params["ln1_beta"])
    ca = multi_head_attention(xn, encoder_output, encoder_output, src_mask, params, "cross", h=h)
    x = linear(ca.reshape(-1, D), params["cross_wo_w"], params["cross_wo_b"],
               residual=x.reshape(-1, D)).reshape(B, Sq, D)

    # Residual connection 2: feed-forward; ReLU fused into linear 1, residual fused into linear 2.
    xn = layer_norm(x, params["ln2_alpha"], params["ln2_beta"])
    hidden = linear(xn.reshape(-1, D), params["ff1_w"], params["ff1_b"], activation="relu")
    x = linear(hidden, params["ff2_w"], params["ff2_b"],
               residual=x.reshape(-1, D)).reshape(B, Sq, D)
    return x


# ---------------------------------------------------------------------------
# Pure-JAX reference (same bf16-matmul / f32-accumulate numerics) for the sanity check
# ---------------------------------------------------------------------------
def _reference_decoder_block(x, encoder_output, src_mask, tgt_mask, params, *, h, eps=LN_EPS):
    def lin(xx, w, b):
        return jnp.dot(xx.astype(jnp.bfloat16), w.astype(jnp.bfloat16),
                       preferred_element_type=jnp.float32) + b

    def ln(xx, a, bb):
        mean = jnp.mean(xx, axis=-1, keepdims=True)
        var = jnp.sum((xx - mean) ** 2, axis=-1, keepdims=True) / (xx.shape[-1] - 1)
        return a * (xx - mean) / (jnp.sqrt(var) + eps) + bb

    def mha(q_in, kv_in, mask, pre):
        B, Sq, D = q_in.shape
        Skv = kv_in.shape[1]
        dk = D // h
        scale = 1.0 / math.sqrt(dk)
        q = lin(q_in, params[f"{pre}_wq_w"], params[f"{pre}_wq_b"]).reshape(B, Sq, h, dk).transpose(0, 2, 1, 3)
        k = lin(kv_in, params[f"{pre}_wk_w"], params[f"{pre}_wk_b"]).reshape(B, Skv, h, dk).transpose(0, 2, 1, 3)
        v = lin(kv_in, params[f"{pre}_wv_w"], params[f"{pre}_wv_b"]).reshape(B, Skv, h, dk).transpose(0, 2, 1, 3)
        s = jnp.einsum("bhqd,bhkd->bhqk", q.astype(jnp.bfloat16), k.astype(jnp.bfloat16),
                       preferred_element_type=jnp.float32) * scale
        s = jnp.where(mask == 0, NEG_INF_FILL, s)
        s = s - jnp.max(s, axis=-1, keepdims=True)
        p = jnp.exp(s)
        p = p / jnp.sum(p, axis=-1, keepdims=True)
        ctx = jnp.einsum("bhqk,bhkd->bhqd", p.astype(jnp.bfloat16), v.astype(jnp.bfloat16),
                         preferred_element_type=jnp.float32)
        ctx = ctx.transpose(0, 2, 1, 3).reshape(B, Sq, D)
        return lin(ctx, params[f"{pre}_wo_w"], params[f"{pre}_wo_b"])

    xn = ln(x, params["ln0_alpha"], params["ln0_beta"])
    x = x + mha(xn, xn, tgt_mask, "self")
    xn = ln(x, params["ln1_alpha"], params["ln1_beta"])
    x = x + mha(xn, encoder_output, src_mask, "cross")
    xn = ln(x, params["ln2_alpha"], params["ln2_beta"])
    hidden = jnp.maximum(lin(xn, params["ff1_w"], params["ff1_b"]), 0.0)
    x = x + lin(hidden, params["ff2_w"], params["ff2_b"])
    return x


if __name__ == "__main__":
    batch, tgt_len, src_len = 2, 8, 8
    d_model, n_heads, d_ff = 32, 4, 64

    root = jax.random.PRNGKey(0)
    keys = iter(jax.random.split(root, 40))

    def uniform(shape, bound):
        return jax.random.uniform(next(keys), shape, jnp.float32, -bound, bound)

    params = {}

    def add_linear(name, fan_in, fan_out):
        bound = 1.0 / math.sqrt(fan_in)
        params[f"{name}_w"] = uniform((fan_in, fan_out), bound)  # [in, out] layout
        params[f"{name}_b"] = uniform((fan_out,), bound)

    for prefix in ("self", "cross"):
        for proj in ("wq", "wk", "wv", "wo"):
            add_linear(f"{prefix}_{proj}", d_model, d_model)
    add_linear("ff1", d_model, d_ff)
    add_linear("ff2", d_ff, d_model)
    for i in range(3):
        params[f"ln{i}_alpha"] = 1.0 + 0.1 * jax.random.normal(next(keys), (d_model,), jnp.float32)
        params[f"ln{i}_beta"] = 0.1 * jax.random.normal(next(keys), (d_model,), jnp.float32)

    x = jax.random.normal(next(keys), (batch, tgt_len, d_model), jnp.float32)
    encoder_output = jax.random.normal(next(keys), (batch, src_len, d_model), jnp.float32)

    # Causal target mask [B,1,Sq,Sq]; source mask pads out the last 2 positions of batch 1.
    tgt_mask = jnp.broadcast_to(
        jnp.tril(jnp.ones((tgt_len, tgt_len), jnp.float32))[None, None],
        (batch, 1, tgt_len, tgt_len))
    src_valid = jnp.ones((batch, src_len), jnp.float32).at[1, src_len - 2:].set(0.0)
    src_mask = jnp.broadcast_to(src_valid[:, None, None, :], (batch, 1, tgt_len, src_len))

    out = decoder_block(x, encoder_output, src_mask, tgt_mask, params, h=n_heads)
    out = jax.block_until_ready(out)

    ref = _reference_decoder_block(x, encoder_output, src_mask, tgt_mask, params, h=n_heads)

    assert out.shape == (batch, tgt_len, d_model)
    assert bool(jnp.all(jnp.isfinite(out)))
    assert jnp.allclose(out, ref, atol=2e-3, rtol=2e-3), float(jnp.max(jnp.abs(out - ref)))

    print("KERNEL_OK")
</pallas_src>

<mosaic_0001>
module attributes {stable_mosaic.version = 11 : i64} {
  func.func @kernel(%arg0: i32, %arg1: memref<16x32xf32, #tpu.memory_space<vmem>>, %arg2: memref<1x32xf32, #tpu.memory_space<vmem>>, %arg3: memref<1x32xf32, #tpu.memory_space<vmem>>, %arg4: memref<16x32xf32, #tpu.memory_space<vmem>>) attributes {dimension_semantics = [#tpu.dimension_semantics<parallel>], iteration_bounds = array<i64: 1>, scalar_prefetch = 0 : i64, scratch_operands = 0 : i64, tpu.core_type = #tpu.core_type<tc>, window_params = [{transform_indices = @transform_0, window_bounds = array<i64: 16, 32>}, {pipeline_mode = #tpu.pipeline_mode<synchronous>, transform_indices = @transform_1, window_bounds = array<i64: 1, 32>}, {pipeline_mode = #tpu.pipeline_mode<synchronous>, transform_indices = @transform_2, window_bounds = array<i64: 1, 32>}, {transform_indices = @transform_3, window_bounds = array<i64: 16, 32>}]} {
    %c0 = arith.constant 0 : index
    %c0_0 = arith.constant 0 : index
    %0 = vector.load %arg1[%c0, %c0_0] : memref<16x32xf32, #tpu.memory_space<vmem>>, vector<16x32xf32>
    %cst = arith.constant dense<0.000000e+00> : vector<16xf32>
    %1 = vector.multi_reduction <add>, %0, %cst [1] : vector<16x32xf32> to vector<16xf32>
    %2 = vector.shape_cast %1 : vector<16xf32> to vector<16x1xf32>
    %cst_1 = arith.constant 3.200000e+01 : f32
    %3 = vector.broadcast %cst_1 : f32 to vector<16x1xf32>
    %4 = arith.divf %2, %3 : vector<16x1xf32>
    %5 = vector.broadcast %4 : vector<16x1xf32> to vector<16x32xf32>
    %6 = arith.subf %0, %5 : vector<16x32xf32>
    %7 = arith.mulf %6, %6 : vector<16x32xf32>
    %cst_2 = arith.constant dense<0.000000e+00> : vector<16xf32>
    %8 = vector.multi_reduction <add>, %7, %cst_2 [1] : vector<16x32xf32> to vector<16xf32>
    %9 = vector.shape_cast %8 : vector<16xf32> to vector<16x1xf32>
    %cst_3 = arith.constant 0.0322580636 : f32
    %10 = vector.broadcast %cst_3 : f32 to vector<16x1xf32>
    %11 = arith.mulf %9, %10 : vector<16x1xf32>
    %c0_4 = arith.constant 0 : index
    %c0_5 = arith.constant 0 : index
    %12 = vector.load %arg2[%c0_4, %c0_5] : memref<1x32xf32, #tpu.memory_space<vmem>>, vector<1x32xf32>
    %13 = vector.broadcast %12 : vector<1x32xf32> to vector<16x32xf32>
    %14 = arith.mulf %13, %6 : vector<16x32xf32>
    %15 = math.sqrt %11 : vector<16x1xf32>
    %cst_6 = arith.constant 9.99999997E-7 : f32
    %16 = vector.broadcast %cst_6 : f32 to vector<16x1xf32>
    %17 = arith.addf %15, %16 : vector<16x1xf32>
    %18 = vector.broadcast %17 : vector<16x1xf32> to vector<16x32xf32>
    %19 = arith.divf %14, %18 : vector<16x32xf32>
    %c0_7 = arith.constant 0 : index
    %c0_8 = arith.constant 0 : index
    %20 = vector.load %arg3[%c0_7, %c0_8] : memref<1x32xf32, #tpu.memory_space<vmem>>, vector<1x32xf32>
    %21 = vector.broadcast %20 : vector<1x32xf32> to vector<16x32xf32>
    %22 = arith.addf %19, %21 : vector<16x32xf32>
    %c0_9 = arith.constant 0 : index
    %c0_10 = arith.constant 0 : index
    %23 = vector.load %arg4[%c0_9, %c0_10] : memref<16x32xf32, #tpu.memory_space<vmem>>, vector<16x32xf32>
    tpu.vector_store %arg4[%c0_9, %c0_10], %22 {strides = array<i32>} : memref<16x32xf32, #tpu.memory_space<vmem>>, vector<16x32xf32>,
    return
  }
  func.func @transform_0(%arg0: i32) -> (i32, i32) {
    %c0_i32 = arith.constant 0 : i32
    %c0_i32_0 = arith.constant 0 : i32
    return %arg0, %c0_i32 : i32, i32
  }
  func.func @transform_1(%arg0: i32) -> (i32, i32) {
    %c0_i32 = arith.constant 0 : i32
    %c0_i32_0 = arith.constant 0 : i32
    %c0_i32_1 = arith.constant 0 : i32
    return %c0_i32, %c0_i32_0 : i32, i32
  }
  func.func @transform_2(%arg0: i32) -> (i32, i32) {
    %c0_i32 = arith.constant 0 : i32
    %c0_i32_0 = arith.constant 0 : i32
    %c0_i32_1 = arith.constant 0 : i32
    return %c0_i32, %c0_i32_0 : i32, i32
  }
  func.func @transform_3(%arg0: i32) -> (i32, i32) {
    %c0_i32 = arith.constant 0 : i32
    %c0_i32_0 = arith.constant 0 : i32
    return %arg0, %c0_i32 : i32, i32
  }
}

</mosaic_0001>

<llo_original>
// kernel: tpu_custom_call.1
$region0: #{tpu_custom_call.1}
  #allocation0 [shape = 'u32[]', space=smem, size = 0x4, offset = 0x4, fixed_abs, tag = 'smem constant byte address 0x4 - core index']
  #allocation1 [shape = 'u32[144,128]{1,0:T(1,128)}', space=vmem, size = 0x12000, scoped, tag = 'internal scratch']
  %s0 = inlined_call_operand.hbm [shape: f32[16,32], index: 0, kind: input, shape index: {}]
  %s1 = inlined_call_operand.vmem [shape: f32[1,32], index: 1, kind: input, shape index: {}]
  %s2 = inlined_call_operand.vmem [shape: f32[1,32], index: 2, kind: input, shape index: {}]
  %s3 = inlined_call_operand.hbm [shape: f32[16,32], index: 3, kind: output, shape index: {}]
  %s4 = sld [smem:[#allocation0]]
  $region26: #{tpu_custom_call.1} parent=0
    _
  %s6 = ssub.s32 1, %s4
  %s7 = scalar_select 0, %s6, %s4
  $region1: #{tpu_custom_call.1} parent=0
    #allocation2 [shape = 'u8[8192]{0}', space=vmem, size = 0x2000, scoped, tag = 'input window, operand 0, single buffered']
    #allocation3 [shape = 's32[1]{0}', space=sflag, size = 0x4, scoped, tag = 'scoped memory for tpu_custom_call.1']
    #allocation4 [shape = 's32[1]{0}', space=sflag, size = 0x4, scoped, tag = 'scoped memory for tpu_custom_call.1']
    #allocation5 [shape = 'u8[8192]{0}', space=vmem, size = 0x2000, scoped, tag = 'output window, operand 0, single buffered']
    %8 = vsyncpa [#allocation3], 0
    %9 = vsyncpa [#allocation4], 0
    // Predicated region
    $region2: #{tpu_custom_call.1} parent=1 // pred_check
      _
    $region3: #{tpu_custom_call.1} parent=1 // pred_check_branch
      %11 = sbr.rel (0) target = $region5
    $region4: #{tpu_custom_call.1} parent=1 // pred_region
      %s13 = ssub.s32 256, 256
      %14 = vsyncadd [#allocation3], %s13
      %s15 = sshll.u32 [#allocation2], 4
      %s16 = int_to_ptr.vmem [resolvable:$true] %s15
      %21 = dma.hbm_to_vmem [thread:$0]  %s0, 256, %s16, [#allocation3], 128, 128, 8
    $region5: #{tpu_custom_call.1} parent=1 // pred_fallthru
      _
    // Predicated region
    $region6: #{tpu_custom_call.1} parent=1 // pred_check
      _
    $region7: #{tpu_custom_call.1} parent=1 // pred_check_branch
      %23 = sbr.rel (0) target = $region9
    $region8: #{tpu_custom_call.1} parent=1 // pred_region
      _
    $region9: #{tpu_custom_call.1} parent=1 // pred_fallthru
      _
    // Predicated region
    $region10: #{tpu_custom_call.1} parent=1 // pred_check
      _
    $region11: #{tpu_custom_call.1} parent=1 // pred_check_branch
      %25 = sbr.rel (0) target = $region13
    $region12: #{tpu_custom_call.1} parent=1 // pred_region
      _
    $region13: #{tpu_custom_call.1} parent=1 // pred_fallthru
      _
    // Predicated region
    $region14: #{tpu_custom_call.1} parent=1 // pred_check
      _
    $region15: #{tpu_custom_call.1} parent=1 // pred_check_branch
      %27 = sbr.rel (0) target = $region17
    $region16: #{tpu_custom_call.1} parent=1 // pred_region
      %28 = dma.done [#allocation3], 256
    $region17: #{tpu_custom_call.1} parent=1 // pred_fallthru
      _
    %v29 = vld [vmem:[#allocation2] sm:$0xff]
    %v30 = vld [vmem:[#allocation2 + $0x8] sm:$0xff]
    %vm31 = vcmask 261120
    %v32 = vsel %vm31, %v29, 0.0
    %33 = vadd.xlane.f32.xlu0 %v32
    %v34 = vpop.xlane.xlu0 %33
    %v35 = vsel %vm31, %v30, 0.0
    %36 = vadd.xlane.f32.xlu0 %v35
    %v37 = vpop.xlane.xlu0 %36
    %v38 = vrcp.pop 32.0
    %v39 = vmul.f32 %v34, %v38
    %v40 = vmul.f32 %v37, %v38
    %v41 = vsub.f32 %v29, %v39
    %v42 = vsub.f32 %v30, %v40
    %v43 = vmul.f32 %v41, %v41
    %v44 = vmul.f32 %v42, %v42
    %v45 = vsel %vm31, %v43, 0.0
    %46 = vadd.xlane.f32.xlu0 %v45
    %v47 = vpop.xlane.xlu0 %46
    %v48 = vsel %vm31, %v44, 0.0
    %49 = vadd.xlane.f32.xlu0 %v48
    %v50 = vpop.xlane.xlu0 %49
    %v51 = vmul.f32 %v47, 0.032258064
    %v52 = vmul.f32 %v50, 0.032258064
    %v53 = vld [vmem:[%s1] sm:$0x1]
    %v55 = vlaneseq
    %v56 = vshrl.u32 %v55, 7
    %v57 = vsub.s32 0, %v56
    %v58 = vrot.slane %v53, %v57
    %v60 = vmul.f32 %v58, %v41
    %v61 = vmul.f32 %v58, %v42
    %v62 = vrsqrt.pop %v51
    %v63 = vmul.f32 %v51, %v62
    %vm64 = vcmp.eq.f32.partialorder %v51, inf
    %v65 = vsel %vm64, %v51, %v63
    %vm66 = vcmp.eq.f32.partialorder %v51, 0.0
    %v67 = vand.u32 %v51, 2147483648
    %v68 = vsel %vm66, %v67, %v65
    %v69 = vrsqrt.pop %v52
    %v70 = vmul.f32 %v52, %v69
    %vm71 = vcmp.eq.f32.partialorder %v52, inf
    %v72 = vsel %vm71, %v52, %v70
    %vm73 = vcmp.eq.f32.partialorder %v52, 0.0
    %v74 = vand.u32 %v52, 2147483648
    %v75 = vsel %vm73, %v74, %v72
    %v76 = vadd.f32 %v68, 1e-06
    %v77 = vadd.f32 %v75, 1e-06
    %v78 = vrcp.pop %v76
    %v79 = vmul.f32 %v60, %v78
    %v80 = vrcp.pop %v77
    %v81 = vmul.f32 %v61, %v80
    %v82 = vld [vmem:[%s2] sm:$0x1]
    %v84 = vlaneseq
    %v85 = vshrl.u32 %v84, 7
    %v86 = vsub.s32 0, %v85
    %v87 = vrot.slane %v82, %v86
    %v89 = vadd.f32 %v79, %v87
    %v90 = vadd.f32 %v81, %v87
    %91 = vst.msk [vmem:[#allocation5] sm:$0xff] %vm31, %v89
    %92 = vst.msk [vmem:[#allocation5 + $0x8] sm:$0xff] %vm31, %v90
    // Predicated region
    $region18: #{tpu_custom_call.1} parent=1 // pred_check
      _
    $region19: #{tpu_custom_call.1} parent=1 // pred_check_branch
      %94 = sbr.rel (0) target = $region21
    $region20: #{tpu_custom_call.1} parent=1 // pred_region
      %s96 = ssub.s32 256, 256
      %97 = vsyncadd [#allocation4], %s96
      %s98 = sshll.u32 [#allocation5], 4
      %s99 = int_to_ptr.vmem [resolvable:$true] %s98
      %104 = dma.vmem_to_hbm [thread:$0]  %s99, 256, %s3, [#allocation4], 128, 128, 8
    $region21: #{tpu_custom_call.1} parent=1 // pred_fallthru
      _
    // Predicated region
    $region22: #{tpu_custom_call.1} parent=1 // pred_check
      _
    $region23: #{tpu_custom_call.1} parent=1 // pred_check_branch
      %106 = sbr.rel (0) target = $region25
    $region24: #{tpu_custom_call.1} parent=1 // pred_region
      %107 = dma.done [#allocation4], 256
    $region25: #{tpu_custom_call.1} parent=1 // pred_fallthru
      _
    %108 = vsyncpa [#allocation3], 1
    %109 = vsyncpa [#allocation4], 1

</llo_original>
